<compile_context>
chip_gen: v5e
topology: v5e:2x2
jax: 0.10.0
libtpu: 0.0.40
codegen_flags: <defaults>
</compile_context>

<pallas_src>
import jax
import jax.numpy as jnp
from jax import lax
from jax.experimental import pallas as pl
from jax.experimental.pallas import tpu as pltpu


def _round_up(x, m):
    return ((x + m - 1) // m) * m


def _pad_gate_rows(w, H, Hp):
    """Zero-pad each of the 4 gate blocks of a (4H, K) array to (4Hp, K)."""
    if Hp == H:
        return w
    K = w.shape[1]
    w4 = w.reshape(4, H, K)
    w4 = jnp.pad(w4, ((0, 0), (0, Hp - H), (0, 0)))
    return w4.reshape(4 * Hp, K)


# ---------------------------------------------------------------------------
# Kernel bodies
# ---------------------------------------------------------------------------
def _matmul_bias_kernel(x_ref, w_ref, b_ref, o_ref):
    """One (bm, bn) output tile of x @ w + b (contraction dim untiled)."""
    o_ref[...] = (
        jnp.dot(x_ref[...], w_ref[...], preferred_element_type=jnp.float32)
        + b_ref[...]
    ).astype(o_ref.dtype)


def _lstm_step_kernel(gx_ref, whh_ref, hid_ref, h_scr, c_scr):
    """One LSTM timestep for one batch shard.

    grid = (num_batch_shards, T-1); the time axis is sequential ("arbitrary"),
    h/c persist in VMEM scratch across it and are zeroed at t == 0.

    gx_ref : (Bb, 4Hp)  precomputed x_t @ W_ih^T + (b_ih + b_hh)
    whh_ref: (Hp, 4Hp)  recurrent weights (constant index_map -> stays resident)
    hid_ref: (Bb, Hp)   h_t written back each step (lane-dense, Hp % 128 == 0)
    """
    t = pl.program_id(1)
    Hp = h_scr.shape[1]

    @pl.when(t == 0)
    def _():
        h_scr[...] = jnp.zeros_like(h_scr)
        c_scr[...] = jnp.zeros_like(c_scr)

    gates = gx_ref[...] + jnp.dot(
        h_scr[...], whh_ref[...], preferred_element_type=jnp.float32
    )  # (Bb, 4Hp), torch gate order i, f, g, o; slices are lane-block aligned.
    i_g = jax.nn.sigmoid(gates[:, 0 * Hp:1 * Hp])
    f_g = jax.nn.sigmoid(gates[:, 1 * Hp:2 * Hp])
    g_g = jnp.tanh(gates[:, 2 * Hp:3 * Hp])
    o_g = jax.nn.sigmoid(gates[:, 3 * Hp:4 * Hp])

    c_new = f_g * c_scr[...] + i_g * g_g
    h_new = o_g * jnp.tanh(c_new)
    c_scr[...] = c_new
    h_scr[...] = h_new
    hid_ref[...] = h_new


# ---------------------------------------------------------------------------
# Forward pass
# ---------------------------------------------------------------------------
@jax.jit
def decoder_rnn_forward(features, captions, params):
    """features: (B, E) float32; captions: (B, 1, L) int32 token ids."""
    emb_table = params["embedding"]          # (V, E)
    w_ih = params["w_ih"]                    # (4H, E)  torch layout
    w_hh = params["w_hh"]                    # (4H, H)
    b_ih = params["b_ih"]                    # (4H,)
    b_hh = params["b_hh"]                    # (4H,)
    w_lin = params["w_lin"]                  # (V, H)
    b_lin = params["b_lin"]                  # (V,)

    B, E = features.shape
    H = w_hh.shape[1]
    V = w_lin.shape[0]

    # embeddings = dropout(embedding(captions)) — Dropout(0.2) treated as
    # eval-mode identity (no scaling).
    # TODO(synk): training-mode dropout would need an in-kernel PRNG mask.
    embeddings = emb_table[captions][:, 0, :, :]          # (B, L, E)
    x = jnp.concatenate([features[:, None, :], embeddings], axis=1)  # (B, T, E)
    T = x.shape[1]
    Tm1 = T - 1                                           # last step's logits dropped

    x_eff = x[:, :Tm1, :].astype(jnp.float32)             # (B, T-1, E)

    # Lane-pad the hidden dim so gate slices and h stores are lane-block dense.
    Hp = _round_up(H, 128)
    G = 4 * Hp

    # Batch shards: split padded batch into 2 independent recurrences when each
    # shard stays a multiple of 8 sublanes (v7x megacore "parallel" axis).
    if _round_up(B, 8) >= 16:
        NB, Bp = 2, _round_up(B, 16)
    else:
        NB, Bp = 1, 8
    Bb = Bp // NB
    if Bp != B:
        x_eff = jnp.pad(x_eff, ((0, Bp - B), (0, 0), (0, 0)))

    # Time-major rows (t, b) so a (Bb, .) block is one shard's timestep.
    R = Tm1 * Bp
    x2d = jnp.transpose(x_eff, (1, 0, 2)).reshape(R, E)   # (R, E)

    # ---- parameter prep (gate-blockwise zero padding keeps numerics exact) --
    wih_p = _pad_gate_rows(w_ih.astype(jnp.float32), H, Hp)           # (4Hp, E)
    whh_p = _pad_gate_rows(w_hh.astype(jnp.float32), H, Hp)           # (4Hp, H)
    whh_p = jnp.pad(whh_p, ((0, 0), (0, Hp - H)))                     # (4Hp, Hp)
    b_comb = (b_ih + b_hh).astype(jnp.float32).reshape(4 * H, 1)
    b_p = _pad_gate_rows(b_comb, H, Hp).reshape(1, G)                 # (1, 4Hp)

    wih_t = jnp.transpose(wih_p)                                      # (E, 4Hp)
    whh_t = jnp.transpose(whh_p)                                      # (Hp, 4Hp)
    wlin_t = jnp.pad(jnp.transpose(w_lin.astype(jnp.float32)),
                     ((0, Hp - H), (0, 0)))                           # (Hp, V)
    blin2 = b_lin.astype(jnp.float32).reshape(1, V)

    # ---- Kernel A: batched input projection gx = x @ W_ih^T + b -------------
    bm_gx = R if R <= 512 else 256
    Rp_gx = _round_up(R, bm_gx)
    x2d_p = x2d if Rp_gx == R else jnp.pad(x2d, ((0, Rp_gx - R), (0, 0)))
    gx = pl.pallas_call(
        _matmul_bias_kernel,
        out_shape=jax.ShapeDtypeStruct((Rp_gx, G), jnp.float32),
        grid=(Rp_gx // bm_gx,),
        in_specs=[
            pl.BlockSpec((bm_gx, E), lambda i: (i, 0)),
            pl.BlockSpec((E, G), lambda i: (0, 0)),
            pl.BlockSpec((1, G), lambda i: (0, 0)),
        ],
        out_specs=pl.BlockSpec((bm_gx, G), lambda i: (i, 0)),
        compiler_params=pltpu.CompilerParams(
            dimension_semantics=("parallel",),
            vmem_limit_bytes=32 * 1024 * 1024),
        cost_estimate=pl.CostEstimate(
            flops=2 * Rp_gx * E * G, transcendentals=0,
            bytes_accessed=4 * (Rp_gx * E + E * G + Rp_gx * G)),
    )(x2d_p, wih_t, b_p)
    gx = gx[:R].reshape(Tm1, Bp, G)

    # ---- Kernel B: LSTM recurrence gridded over (batch shard, time) ---------
    hidden = pl.pallas_call(
        _lstm_step_kernel,
        out_shape=jax.ShapeDtypeStruct((Tm1, Bp, Hp), jnp.float32),
        grid=(NB, Tm1),
        in_specs=[
            pl.BlockSpec((None, Bb, G), lambda b, t: (t, b, 0)),
            pl.BlockSpec((Hp, G), lambda b, t: (0, 0)),
        ],
        out_specs=pl.BlockSpec((None, Bb, Hp), lambda b, t: (t, b, 0)),
        scratch_shapes=[pltpu.VMEM((Bb, Hp), jnp.float32),
                        pltpu.VMEM((Bb, Hp), jnp.float32)],
        compiler_params=pltpu.CompilerParams(
            dimension_semantics=("parallel", "arbitrary"),
            vmem_limit_bytes=32 * 1024 * 1024),
        cost_estimate=pl.CostEstimate(
            flops=2 * Tm1 * Bp * Hp * G,
            transcendentals=5 * Tm1 * Bp * Hp,
            bytes_accessed=4 * (Tm1 * Bp * G + Hp * G + Tm1 * Bp * Hp)),
    )(gx, whh_t)

    # ---- Kernel C: vocab projection, vocab axis outer so W_lin streams once -
    hid2d = hidden.reshape(R, Hp)
    bm = R if R <= 512 else 512
    Rp = _round_up(R, bm)
    bn = min(_round_up(V, 128), 1024)
    Vp = _round_up(V, bn)

    hid_p = hid2d if Rp == R else jnp.pad(hid2d, ((0, Rp - R), (0, 0)))
    wlin_p = wlin_t if Vp == V else jnp.pad(wlin_t, ((0, 0), (0, Vp - V)))
    blin_p = blin2 if Vp == V else jnp.pad(blin2, ((0, 0), (0, Vp - V)))

    logits = pl.pallas_call(
        _matmul_bias_kernel,
        out_shape=jax.ShapeDtypeStruct((Rp, Vp), jnp.float32),
        grid=(Vp // bn, Rp // bm),            # vocab outer, rows inner
        in_specs=[
            pl.BlockSpec((bm, Hp), lambda j, i: (i, 0)),
            pl.BlockSpec((Hp, bn), lambda j, i: (0, j)),
            pl.BlockSpec((1, bn), lambda j, i: (0, j)),
        ],
        out_specs=pl.BlockSpec((bm, bn), lambda j, i: (i, j)),
        compiler_params=pltpu.CompilerParams(
            dimension_semantics=("parallel", "parallel"),
            vmem_limit_bytes=48 * 1024 * 1024),
        cost_estimate=pl.CostEstimate(
            flops=2 * Rp * Hp * Vp, transcendentals=0,
            bytes_accessed=4 * (Rp * Hp * (Vp // bn) + Hp * Vp + Rp * Vp)),
    )(hid_p, wlin_p, blin_p)

    logits = logits[:R, :V].reshape(Tm1, Bp, V)[:, :B, :]   # (T-1, B, V)
    outputs = jnp.transpose(logits, (1, 0, 2))               # (B, T-1, V) == (B, L, V)
    return outputs


def _reference_forward(features, captions, params):
    """Pure-JAX reference (mirrors torch nn.LSTM + nn.Linear semantics)."""
    emb_table = params["embedding"]
    w_ih, w_hh = params["w_ih"], params["w_hh"]
    b_ih, b_hh = params["b_ih"], params["b_hh"]
    w_lin, b_lin = params["w_lin"], params["b_lin"]
    H = w_hh.shape[1]

    embeddings = emb_table[captions][:, 0, :, :]
    x = jnp.concatenate([features[:, None, :], embeddings], axis=1)  # (B, T, E)
    B, T, _ = x.shape

    def step(carry, x_t):
        h, c = carry
        gates = x_t @ w_ih.T + b_ih + h @ w_hh.T + b_hh
        i = jax.nn.sigmoid(gates[:, 0 * H:1 * H])
        f = jax.nn.sigmoid(gates[:, 1 * H:2 * H])
        g = jnp.tanh(gates[:, 2 * H:3 * H])
        o = jax.nn.sigmoid(gates[:, 3 * H:4 * H])
        c = f * c + i * g
        h = o * jnp.tanh(c)
        return (h, c), h

    init = (jnp.zeros((B, H), jnp.float32), jnp.zeros((B, H), jnp.float32))
    _, hs = lax.scan(step, init, jnp.transpose(x, (1, 0, 2)))          # (T, B, H)
    hidden = jnp.transpose(hs, (1, 0, 2))                              # (B, T, H)
    out = hidden @ w_lin.T + b_lin
    return out[:, :-1, :]


if __name__ == "__main__":
    # Small shapes consistent with the module.
    B, L = 2, 8            # batch, caption length
    E, H, V = 32, 32, 128  # embed_size, hidden_size, vocab_size (num_layers=1)

    key = jax.random.PRNGKey(0)
    k_emb, k_wih, k_whh, k_bih, k_bhh, k_lin, k_feat, k_cap = jax.random.split(key, 8)

    stdv = 1.0 / jnp.sqrt(H)
    params = {
        # embedding.weight.data.uniform_(-0.1, 0.1)
        "embedding": jax.random.uniform(k_emb, (V, E), jnp.float32, -0.1, 0.1),
        # nn.LSTM default init: uniform(-1/sqrt(H), 1/sqrt(H)), gate order i,f,g,o
        "w_ih": jax.random.uniform(k_wih, (4 * H, E), jnp.float32, -stdv, stdv),
        "w_hh": jax.random.uniform(k_whh, (4 * H, H), jnp.float32, -stdv, stdv),
        "b_ih": jax.random.uniform(k_bih, (4 * H,), jnp.float32, -stdv, stdv),
        "b_hh": jax.random.uniform(k_bhh, (4 * H,), jnp.float32, -stdv, stdv),
        # linear.weight.data.uniform_(-0.1, 0.1); linear.bias.data.fill_(0)
        "w_lin": jax.random.uniform(k_lin, (V, H), jnp.float32, -0.1, 0.1),
        "b_lin": jnp.zeros((V,), jnp.float32),
    }

    features = jax.random.normal(k_feat, (B, E), jnp.float32)
    # captions are (B, 1, L) so that `embeddings[:, 0, :, :]` in the torch
    # forward is well-formed (4-D embedding output).
    captions = jax.random.randint(k_cap, (B, 1, L), 0, V, jnp.int32)

    out = decoder_rnn_forward(features, captions, params)
    out = jax.block_until_ready(out)
    assert out.shape == (B, L, V), out.shape

    ref = _reference_forward(features, captions, params)
    assert jnp.allclose(out, ref, atol=1e-5, rtol=1e-5), float(jnp.max(jnp.abs(out - ref)))

    print("KERNEL_OK")
</pallas_src>

<mosaic_0001>
module attributes {stable_mosaic.version = 11 : i64} {
  func.func @_matmul_bias_kernel(%arg0: i32, %arg1: i32, %arg2: memref<64x128xf32, #tpu.memory_space<vmem>>, %arg3: memref<128x128xf32, #tpu.memory_space<vmem>>, %arg4: memref<1x128xf32, #tpu.memory_space<vmem>>, %arg5: memref<64x128xf32, #tpu.memory_space<vmem>>) attributes {dimension_semantics = [#tpu.dimension_semantics<parallel>, #tpu.dimension_semantics<parallel>], iteration_bounds = array<i64: 1, 1>, scalar_prefetch = 0 : i64, scratch_operands = 0 : i64, tpu.core_type = #tpu.core_type<tc>, window_params = [{transform_indices = @transform_0, window_bounds = array<i64: 64, 128>}, {transform_indices = @transform_1, window_bounds = array<i64: 128, 128>}, {transform_indices = @transform_2, window_bounds = array<i64: 1, 128>}, {transform_indices = @transform_3, window_bounds = array<i64: 64, 128>}]} {
    %c0 = arith.constant 0 : index
    %c0_0 = arith.constant 0 : index
    %0 = vector.load %arg2[%c0, %c0_0] : memref<64x128xf32, #tpu.memory_space<vmem>>, vector<64x128xf32>
    %c0_1 = arith.constant 0 : index
    %c0_2 = arith.constant 0 : index
    %1 = vector.load %arg3[%c0_1, %c0_2] : memref<128x128xf32, #tpu.memory_space<vmem>>, vector<128x128xf32>
    %cst = arith.constant dense<0.000000e+00> : vector<64x128xf32>
    %2 = tpu.matmul %0, %1, %cst {dimension_numbers = #tpu.dot_dimension_numbers<[1], [0], [0], [1], [0, 0, 1, 1], [], []>} : vector<64x128xf32>, vector<128x128xf32>, vector<64x128xf32> -> vector<64x128xf32>
    %c0_3 = arith.constant 0 : index
    %c0_4 = arith.constant 0 : index
    %3 = vector.load %arg4[%c0_3, %c0_4] : memref<1x128xf32, #tpu.memory_space<vmem>>, vector<1x128xf32>
    %4 = vector.broadcast %3 : vector<1x128xf32> to vector<64x128xf32>
    %5 = arith.addf %2, %4 : vector<64x128xf32>
    %c0_5 = arith.constant 0 : index
    %c0_6 = arith.constant 0 : index
    %6 = vector.load %arg5[%c0_5, %c0_6] : memref<64x128xf32, #tpu.memory_space<vmem>>, vector<64x128xf32>
    tpu.vector_store %arg5[%c0_5, %c0_6], %5 {strides = array<i32>} : memref<64x128xf32, #tpu.memory_space<vmem>>, vector<64x128xf32>,
    return
  }
  func.func @transform_0(%arg0: i32, %arg1: i32) -> (i32, i32) {
    %c0_i32 = arith.constant 0 : i32
    %c0_i32_0 = arith.constant 0 : i32
    return %arg1, %c0_i32 : i32, i32
  }
  func.func @transform_1(%arg0: i32, %arg1: i32) -> (i32, i32) {
    %c0_i32 = arith.constant 0 : i32
    %c0_i32_0 = arith.constant 0 : i32
    return %c0_i32, %arg0 : i32, i32
  }
  func.func @transform_2(%arg0: i32, %arg1: i32) -> (i32, i32) {
    %c0_i32 = arith.constant 0 : i32
    %c0_i32_0 = arith.constant 0 : i32
    return %c0_i32, %arg0 : i32, i32
  }
  func.func @transform_3(%arg0: i32, %arg1: i32) -> (i32, i32) {
    %c0_i32 = arith.constant 0 : i32
    return %arg1, %arg0 : i32, i32
  }
}

module attributes {stable_mosaic.version = 11 : i64} {
  func.func @_matmul_bias_kernel(%arg0: i32, %arg1: memref<64x32xf32, #tpu.memory_space<vmem>>, %arg2: memref<32x512xf32, #tpu.memory_space<vmem>>, %arg3: memref<1x512xf32, #tpu.memory_space<vmem>>, %arg4: memref<64x512xf32, #tpu.memory_space<vmem>>) attributes {dimension_semantics = [#tpu.dimension_semantics<parallel>], iteration_bounds = array<i64: 1>, scalar_prefetch = 0 : i64, scratch_operands = 0 : i64, tpu.core_type = #tpu.core_type<tc>, window_params = [{transform_indices = @transform_0, window_bounds = array<i64: 64, 32>}, {pipeline_mode = #tpu.pipeline_mode<synchronous>, transform_indices = @transform_1, window_bounds = array<i64: 32, 512>}, {pipeline_mode = #tpu.pipeline_mode<synchronous>, transform_indices = @transform_2, window_bounds = array<i64: 1, 512>}, {transform_indices = @transform_3, window_bounds = array<i64: 64, 512>}]} {
    %c0 = arith.constant 0 : index
    %c0_0 = arith.constant 0 : index
    %0 = vector.load %arg1[%c0, %c0_0] : memref<64x32xf32, #tpu.memory_space<vmem>>, vector<64x32xf32>
    %c0_1 = arith.constant 0 : index
    %c0_2 = arith.constant 0 : index
    %1 = vector.load %arg2[%c0_1, %c0_2] : memref<32x512xf32, #tpu.memory_space<vmem>>, vector<32x512xf32>
    %cst = arith.constant dense<0.000000e+00> : vector<64x512xf32>
    %2 = tpu.matmul %0, %1, %cst {dimension_numbers = #tpu.dot_dimension_numbers<[1], [0], [0], [1], [0, 0, 1, 1], [], []>} : vector<64x32xf32>, vector<32x512xf32>, vector<64x512xf32> -> vector<64x512xf32>
    %c0_3 = arith.constant 0 : index
    %c0_4 = arith.constant 0 : index
    %3 = vector.load %arg3[%c0_3, %c0_4] : memref<1x512xf32, #tpu.memory_space<vmem>>, vector<1x512xf32>
    %4 = vector.broadcast %3 : vector<1x512xf32> to vector<64x512xf32>
    %5 = arith.addf %2, %4 : vector<64x512xf32>
    %c0_5 = arith.constant 0 : index
    %c0_6 = arith.constant 0 : index
    %6 = vector.load %arg4[%c0_5, %c0_6] : memref<64x512xf32, #tpu.memory_space<vmem>>, vector<64x512xf32>
    tpu.vector_store %arg4[%c0_5, %c0_6], %5 {strides = array<i32>} : memref<64x512xf32, #tpu.memory_space<vmem>>, vector<64x512xf32>,
    return
  }
  func.func @transform_0(%arg0: i32) -> (i32, i32) {
    %c0_i32 = arith.constant 0 : i32
    %c0_i32_0 = arith.constant 0 : i32
    return %arg0, %c0_i32 : i32, i32
  }
  func.func @transform_1(%arg0: i32) -> (i32, i32) {
    %c0_i32 = arith.constant 0 : i32
    %c0_i32_0 = arith.constant 0 : i32
    %c0_i32_1 = arith.constant 0 : i32
    return %c0_i32, %c0_i32_0 : i32, i32
  }
  func.func @transform_2(%arg0: i32) -> (i32, i32) {
    %c0_i32 = arith.constant 0 : i32
    %c0_i32_0 = arith.constant 0 : i32
    %c0_i32_1 = arith.constant 0 : i32
    return %c0_i32, %c0_i32_0 : i32, i32
  }
  func.func @transform_3(%arg0: i32) -> (i32, i32) {
    %c0_i32 = arith.constant 0 : i32
    %c0_i32_0 = arith.constant 0 : i32
    return %arg0, %c0_i32 : i32, i32
  }
}

module attributes {stable_mosaic.version = 11 : i64} {
  func.func @_lstm_step_kernel(%arg0: i32, %arg1: i32, %arg2: memref<1x8x512xf32, #tpu.memory_space<vmem>>, %arg3: memref<128x512xf32, #tpu.memory_space<vmem>>, %arg4: memref<1x8x128xf32, #tpu.memory_space<vmem>>, %arg5: memref<8x128xf32, #tpu.memory_space<vmem>>, %arg6: memref<8x128xf32, #tpu.memory_space<vmem>>) attributes {dimension_semantics = [#tpu.dimension_semantics<parallel>, #tpu.dimension_semantics<arbitrary>], iteration_bounds = array<i64: 1, 8>, scalar_prefetch = 0 : i64, scratch_operands = 2 : i64, tpu.core_type = #tpu.core_type<tc>, window_params = [{transform_indices = @transform_0, window_bounds = array<i64: 1, 8, 512>}, {pipeline_mode = #tpu.pipeline_mode<synchronous>, transform_indices = @transform_1, window_bounds = array<i64: 128, 512>}, {transform_indices = @transform_2, window_bounds = array<i64: 1, 8, 128>}]} {
    %c0_i32 = arith.constant 0 : i32
    %0 = arith.cmpi eq, %arg1, %c0_i32 : i32
    %1 = arith.extui %0 : i1 to i32
    %c0_i32_0 = arith.constant 0 : i32
    %2 = arith.cmpi ne, %1, %c0_i32_0 : i32
    scf.if %2 {
      %cst_19 = arith.constant 0.000000e+00 : f32
      %40 = vector.broadcast %cst_19 : f32 to vector<8x128xf32>
      %c0_20 = arith.constant 0 : index
      %c0_21 = arith.constant 0 : index
      %41 = vector.load %arg5[%c0_20, %c0_21] : memref<8x128xf32, #tpu.memory_space<vmem>>, vector<8x128xf32>
      tpu.vector_store %arg5[%c0_20, %c0_21], %40 {strides = array<i32>} : memref<8x128xf32, #tpu.memory_space<vmem>>, vector<8x128xf32>,
      %cst_22 = arith.constant 0.000000e+00 : f32
      %42 = vector.broadcast %cst_22 : f32 to vector<8x128xf32>
      %c0_23 = arith.constant 0 : index
      %c0_24 = arith.constant 0 : index
      %43 = vector.load %arg6[%c0_23, %c0_24] : memref<8x128xf32, #tpu.memory_space<vmem>>, vector<8x128xf32>
      tpu.vector_store %arg6[%c0_23, %c0_24], %42 {strides = array<i32>} : memref<8x128xf32, #tpu.memory_space<vmem>>, vector<8x128xf32>,
    } else {
    }
    %c0 = arith.constant 0 : index
    %c0_1 = arith.constant 0 : index
    %c0_2 = arith.constant 0 : index
    %3 = vector.load %arg2[%c0, %c0_1, %c0_2] : memref<1x8x512xf32, #tpu.memory_space<vmem>>, vector<1x8x512xf32>
    %4 = vector.shape_cast %3 : vector<1x8x512xf32> to vector<8x512xf32>
    %c0_3 = arith.constant 0 : index
    %c0_4 = arith.constant 0 : index
    %5 = vector.load %arg5[%c0_3, %c0_4] : memref<8x128xf32, #tpu.memory_space<vmem>>, vector<8x128xf32>
    %c0_5 = arith.constant 0 : index
    %c0_6 = arith.constant 0 : index
    %6 = vector.load %arg3[%c0_5, %c0_6] : memref<128x512xf32, #tpu.memory_space<vmem>>, vector<128x512xf32>
    %cst = arith.constant dense<0.000000e+00> : vector<8x512xf32>
    %7 = tpu.matmul %5, %6, %cst {dimension_numbers = #tpu.dot_dimension_numbers<[1], [0], [0], [1], [0, 0, 1, 1], [], []>} : vector<8x128xf32>, vector<128x512xf32>, vector<8x512xf32> -> vector<8x512xf32>
    %8 = arith.addf %4, %7 : vector<8x512xf32>
    %9 = vector.extract_strided_slice %8 {offsets = [0, 0], sizes = [8, 128], strides = [1, 1]} : vector<8x512xf32> to vector<8x128xf32>
    %10 = arith.negf %9 : vector<8x128xf32>
    %11 = math.exp %10 : vector<8x128xf32>
    %cst_7 = arith.constant 1.000000e+00 : f32
    %12 = vector.broadcast %cst_7 : f32 to vector<8x128xf32>
    %13 = arith.addf %12, %11 : vector<8x128xf32>
    %14 = arith.divf %12, %13 : vector<8x128xf32>
    %15 = vector.extract_strided_slice %8 {offsets = [0, 128], sizes = [8, 128], strides = [1, 1]} : vector<8x512xf32> to vector<8x128xf32>
    %16 = arith.negf %15 : vector<8x128xf32>
    %17 = math.exp %16 : vector<8x128xf32>
    %cst_8 = arith.constant 1.000000e+00 : f32
    %18 = vector.broadcast %cst_8 : f32 to vector<8x128xf32>
    %19 = arith.addf %18, %17 : vector<8x128xf32>
    %20 = arith.divf %18, %19 : vector<8x128xf32>
    %21 = vector.extract_strided_slice %8 {offsets = [0, 256], sizes = [8, 128], strides = [1, 1]} : vector<8x512xf32> to vector<8x128xf32>
    %22 = math.tanh %21 : vector<8x128xf32>
    %23 = vector.extract_strided_slice %8 {offsets = [0, 384], sizes = [8, 128], strides = [1, 1]} : vector<8x512xf32> to vector<8x128xf32>
    %24 = arith.negf %23 : vector<8x128xf32>
    %25 = math.exp %24 : vector<8x128xf32>
    %cst_9 = arith.constant 1.000000e+00 : f32
    %26 = vector.broadcast %cst_9 : f32 to vector<8x128xf32>
    %27 = arith.addf %26, %25 : vector<8x128xf32>
    %28 = arith.divf %26, %27 : vector<8x128xf32>
    %c0_10 = arith.constant 0 : index
    %c0_11 = arith.constant 0 : index
    %29 = vector.load %arg6[%c0_10, %c0_11] : memref<8x128xf32, #tpu.memory_space<vmem>>, vector<8x128xf32>
    %30 = arith.mulf %20, %29 : vector<8x128xf32>
    %31 = arith.mulf %14, %22 : vector<8x128xf32>
    %32 = arith.addf %30, %31 : vector<8x128xf32>
    %33 = math.tanh %32 : vector<8x128xf32>
    %34 = arith.mulf %28, %33 : vector<8x128xf32>
    %c0_12 = arith.constant 0 : index
    %c0_13 = arith.constant 0 : index
    %35 = vector.load %arg6[%c0_12, %c0_13] : memref<8x128xf32, #tpu.memory_space<vmem>>, vector<8x128xf32>
    tpu.vector_store %arg6[%c0_12, %c0_13], %32 {strides = array<i32>} : memref<8x128xf32, #tpu.memory_space<vmem>>, vector<8x128xf32>,
    %c0_14 = arith.constant 0 : index
    %c0_15 = arith.constant 0 : index
    %36 = vector.load %arg5[%c0_14, %c0_15] : memref<8x128xf32, #tpu.memory_space<vmem>>, vector<8x128xf32>
    tpu.vector_store %arg5[%c0_14, %c0_15], %34 {strides = array<i32>} : memref<8x128xf32, #tpu.memory_space<vmem>>, vector<8x128xf32>,
    %c0_16 = arith.constant 0 : index
    %c0_17 = arith.constant 0 : index
    %c0_18 = arith.constant 0 : index
    %37 = vector.load %arg4[%c0_16, %c0_17, %c0_18] : memref<1x8x128xf32, #tpu.memory_space<vmem>>, vector<1x8x128xf32>
    %38 = vector.shape_cast %37 : vector<1x8x128xf32> to vector<8x128xf32>
    %39 = vector.shape_cast %34 : vector<8x128xf32> to vector<1x8x128xf32>
    tpu.vector_store %arg4[%c0_16, %c0_17, %c0_18], %39 {strides = array<i32>} : memref<1x8x128xf32, #tpu.memory_space<vmem>>, vector<1x8x128xf32>,
    return
  }
  func.func @transform_0(%arg0: i32, %arg1: i32) -> (i32, i32, i32) {
    %c0_i32 = arith.constant 0 : i32
    %c0_i32_0 = arith.constant 0 : i32
    return %arg1, %arg0, %c0_i32 : i32, i32, i32
  }
  func.func @transform_1(%arg0: i32, %arg1: i32) -> (i32, i32) {
    %c0_i32 = arith.constant 0 : i32
    %c0_i32_0 = arith.constant 0 : i32
    %c0_i32_1 = arith.constant 0 : i32
    return %c0_i32, %c0_i32_0 : i32, i32
  }
  func.func @transform_2(%arg0: i32, %arg1: i32) -> (i32, i32, i32) {
    %c0_i32 = arith.constant 0 : i32
    %c0_i32_0 = arith.constant 0 : i32
    return %arg1, %arg0, %c0_i32 : i32, i32, i32
  }
}

</mosaic_0001>

<llo_original>
// kernel: decoder_rnn_forward.5
$region0: #{decoder_rnn_forward.5}
  #allocation0 [shape = 'u32[]', space=smem, size = 0x4, offset = 0x4, fixed_abs, tag = 'smem constant byte address 0x4 - core index']
  #allocation1 [shape = 'u32[72,128]{1,0:T(1,128)}', space=vmem, size = 0x9000, scoped, tag = 'internal scratch']
  %s0 = inlined_call_operand.vmem [shape: f32[64,128], index: 0, kind: input, shape index: {}]
  %s1 = inlined_call_operand.vmem [shape: f32[128,128], index: 1, kind: input, shape index: {}]
  %s2 = inlined_call_operand.vmem [shape: f32[1,128], index: 2, kind: input, shape index: {}]
  %s3 = inlined_call_operand.vmem [shape: f32[64,128], index: 3, kind: output, shape index: {}]
  %s4 = sld [smem:[#allocation0]]
  $region22: #{decoder_rnn_forward.5} parent=0
    _
  %s6 = ssub.s32 1, %s4
  %s7 = scalar_select 0, %s6, %s4
  // Predicated region
  $region2: #{decoder_rnn_forward.5} parent=0 // pred_check
    _
  $region3: #{decoder_rnn_forward.5} parent=0 // pred_check_branch
    %9 = sbr.rel (0) target = $region5
  $region4: #{decoder_rnn_forward.5} parent=0 // pred_region
    _
  $region5: #{decoder_rnn_forward.5} parent=0 // pred_fallthru
    _
  // Predicated region
  $region6: #{decoder_rnn_forward.5} parent=0 // pred_check
    _
  $region7: #{decoder_rnn_forward.5} parent=0 // pred_check_branch
    %11 = sbr.rel (0) target = $region9
  $region8: #{decoder_rnn_forward.5} parent=0 // pred_region
    _
  $region9: #{decoder_rnn_forward.5} parent=0 // pred_fallthru
    _
  // Predicated region
  $region10: #{decoder_rnn_forward.5} parent=0 // pred_check
    _
  $region11: #{decoder_rnn_forward.5} parent=0 // pred_check_branch
    %13 = sbr.rel (0) target = $region13
  $region12: #{decoder_rnn_forward.5} parent=0 // pred_region
    _
  $region13: #{decoder_rnn_forward.5} parent=0 // pred_fallthru
    _
  %v14 = vld [vmem:[%s0] sm:$0xff]
  %v15 = vld [vmem:[%s0 + $0x8] sm:$0xff]
  %v16 = vld [vmem:[%s0 + $0x10] sm:$0xff]
  %v17 = vld [vmem:[%s0 + $0x18] sm:$0xff]
  %v18 = vld [vmem:[%s0 + $0x20] sm:$0xff]
  %v19 = vld [vmem:[%s0 + $0x28] sm:$0xff]
  %v20 = vld [vmem:[%s0 + $0x30] sm:$0xff]
  %v21 = vld [vmem:[%s0 + $0x38] sm:$0xff]
  %v22 = vld [vmem:[%s1] sm:$0xff]
  %v23 = vld [vmem:[%s1 + $0x8] sm:$0xff]
  %v24 = vld [vmem:[%s1 + $0x10] sm:$0xff]
  %v25 = vld [vmem:[%s1 + $0x18] sm:$0xff]
  %v26 = vld [vmem:[%s1 + $0x20] sm:$0xff]
  %v27 = vld [vmem:[%s1 + $0x28] sm:$0xff]
  %v28 = vld [vmem:[%s1 + $0x30] sm:$0xff]
  %v29 = vld [vmem:[%s1 + $0x38] sm:$0xff]
  %v30 = vld [vmem:[%s1 + $0x40] sm:$0xff]
  %v31 = vld [vmem:[%s1 + $0x48] sm:$0xff]
  %v32 = vld [vmem:[%s1 + $0x50] sm:$0xff]
  %v33 = vld [vmem:[%s1 + $0x58] sm:$0xff]
  %v34 = vld [vmem:[%s1 + $0x60] sm:$0xff]
  %v35 = vld [vmem:[%s1 + $0x68] sm:$0xff]
  %v36 = vld [vmem:[%s1 + $0x70] sm:$0xff]
  %v37 = vld [vmem:[%s1 + $0x78] sm:$0xff]
  %v38 = vld [vmem:[%s2] sm:$0x1]
  %v40 = vperm.slane %v38, 0
  %42 = vmatpush.msra.mxu0 %v37
  %43 = vmatpush.msra.mxu0 %v36
  %44 = vmatpush.msra.mxu0 %v35
  %45 = vmatpush.msra.mxu0 %v34
  %46 = vmatpush.msra.mxu0 %v33
  %47 = vmatpush.msra.mxu0 %v32
  %48 = vmatpush.msra.mxu0 %v31
  %49 = vmatpush.msra.mxu0 %v30
  %50 = vmatpush.msra.mxu0 %v29
  %51 = vmatpush.msra.mxu0 %v28
  %52 = vmatpush.msra.mxu0 %v27
  %53 = vmatpush.msra.mxu0 %v26
  %54 = vmatpush.msra.mxu0 %v25
  %55 = vmatpush.msra.mxu0 %v24
  %56 = vmatpush.msra.mxu0 %v23
  %57 = vmatpush.msra.mxu0 %v22
  %58 = vmatmul.f32.gmra.mxu0 %v14
  %v59 = vpop.f32.mrf.mxu0
  %v60 = vadd.f32 %v40, %v59
  %61 = vmatmul.f32.gmra.mxu0 %v15
  %v62 = vpop.f32.mrf.mxu0
  %v63 = vadd.f32 %v40, %v62
  %64 = vmatmul.f32.gmra.mxu0 %v16
  %v65 = vpop.f32.mrf.mxu0
  %v66 = vadd.f32 %v40, %v65
  %67 = vmatmul.f32.gmra.mxu0 %v17
  %v68 = vpop.f32.mrf.mxu0
  %v69 = vadd.f32 %v40, %v68
  %70 = vmatmul.f32.gmra.mxu0 %v18
  %v71 = vpop.f32.mrf.mxu0
  %v72 = vadd.f32 %v40, %v71
  %73 = vmatmul.f32.gmra.mxu0 %v19
  %v74 = vpop.f32.mrf.mxu0
  %v75 = vadd.f32 %v40, %v74
  %76 = vmatmul.f32.gmra.mxu0 %v20
  %v77 = vpop.f32.mrf.mxu0
  %v78 = vadd.f32 %v40, %v77
  %79 = vmatmul.f32.gmra.mxu0 %v21
  %v80 = vpop.f32.mrf.mxu0
  %v81 = vadd.f32 %v40, %v80
  %82 = vdwg.mxu0
  %83 = vst [vmem:[%s3] sm:$0xff] %v60
  %84 = vst [vmem:[%s3 + $0x8] sm:$0xff] %v63
  %85 = vst [vmem:[%s3 + $0x10] sm:$0xff] %v66
  %86 = vst [vmem:[%s3 + $0x18] sm:$0xff] %v69
  %87 = vst [vmem:[%s3 + $0x20] sm:$0xff] %v72
  %88 = vst [vmem:[%s3 + $0x28] sm:$0xff] %v75
  %89 = vst [vmem:[%s3 + $0x30] sm:$0xff] %v78
  %90 = vst [vmem:[%s3 + $0x38] sm:$0xff] %v81
  // Predicated region
  $region14: #{decoder_rnn_forward.5} parent=0 // pred_check
    _
  $region15: #{decoder_rnn_forward.5} parent=0 // pred_check_branch
    %92 = sbr.rel (0) target = $region17
  $region16: #{decoder_rnn_forward.5} parent=0 // pred_region
    _
  $region17: #{decoder_rnn_forward.5} parent=0 // pred_fallthru
    _
  // Predicated region
  $region18: #{decoder_rnn_forward.5} parent=0 // pred_check
    _
  $region19: #{decoder_rnn_forward.5} parent=0 // pred_check_branch
    %94 = sbr.rel (0) target = $region21
  $region20: #{decoder_rnn_forward.5} parent=0 // pred_region
    _
  $region21: #{decoder_rnn_forward.5} parent=0 // pred_fallthru
    _

// kernel: decoder_rnn_forward.3
$region0: #{decoder_rnn_forward.3}
  #allocation0 [shape = 'u32[]', space=smem, size = 0x4, offset = 0x4, fixed_abs, tag = 'smem constant byte address 0x4 - core index']
  #allocation1 [shape = 'u32[72,128]{1,0:T(1,128)}', space=vmem, size = 0x9000, scoped, tag = 'internal scratch']
  %s0 = inlined_call_operand.vmem [shape: f32[64,32], index: 0, kind: input, shape index: {}]
  %s1 = inlined_call_operand.vmem [shape: f32[32,512], index: 1, kind: input, shape index: {}]
  %s2 = inlined_call_operand.vmem [shape: f32[1,512], index: 2, kind: input, shape index: {}]
  %s3 = inlined_call_operand.vmem [shape: f32[64,512], index: 3, kind: output, shape index: {}]
  %s4 = sld [smem:[#allocation0]]
  $region22: #{decoder_rnn_forward.3} parent=0
    _
  %s6 = ssub.s32 1, %s4
  %s7 = scalar_select 0, %s6, %s4
  // Predicated region
  $region2: #{decoder_rnn_forward.3} parent=0 // pred_check
    _
  $region3: #{decoder_rnn_forward.3} parent=0 // pred_check_branch
    %9 = sbr.rel (0) target = $region5
  $region4: #{decoder_rnn_forward.3} parent=0 // pred_region
    _
  $region5: #{decoder_rnn_forward.3} parent=0 // pred_fallthru
    _
  // Predicated region
  $region6: #{decoder_rnn_forward.3} parent=0 // pred_check
    _
  $region7: #{decoder_rnn_forward.3} parent=0 // pred_check_branch
    %11 = sbr.rel (0) target = $region9
  $region8: #{decoder_rnn_forward.3} parent=0 // pred_region
    _
  $region9: #{decoder_rnn_forward.3} parent=0 // pred_fallthru
    _
  // Predicated region
  $region10: #{decoder_rnn_forward.3} parent=0 // pred_check
    _
  $region11: #{decoder_rnn_forward.3} parent=0 // pred_check_branch
    %13 = sbr.rel (0) target = $region13
  $region12: #{decoder_rnn_forward.3} parent=0 // pred_region
    _
  $region13: #{decoder_rnn_forward.3} parent=0 // pred_fallthru
    _
  %v14 = vld [vmem:[%s0] sm:$0xff]
  %v15 = vld [vmem:[%s0 + $0x8] sm:$0xff]
  %v16 = vld [vmem:[%s0 + $0x10] sm:$0xff]
  %v17 = vld [vmem:[%s0 + $0x18] sm:$0xff]
  %v18 = vld [vmem:[%s0 + $0x20] sm:$0xff]
  %v19 = vld [vmem:[%s0 + $0x28] sm:$0xff]
  %v20 = vld [vmem:[%s0 + $0x30] sm:$0xff]
  %v21 = vld [vmem:[%s0 + $0x38] sm:$0xff]
  %v22 = vld [vmem:[%s1] sm:$0xff]
  %v23 = vld [vmem:[%s1 + $0x8] sm:$0xff]
  %v24 = vld [vmem:[%s1 + $0x10] sm:$0xff]
  %v25 = vld [vmem:[%s1 + $0x18] sm:$0xff]
  %v26 = vld [vmem:[%s1 + $0x20] sm:$0xff]
  %v27 = vld [vmem:[%s1 + $0x28] sm:$0xff]
  %v28 = vld [vmem:[%s1 + $0x30] sm:$0xff]
  %v29 = vld [vmem:[%s1 + $0x38] sm:$0xff]
  %v30 = vld [vmem:[%s1 + $0x40] sm:$0xff]
  %v31 = vld [vmem:[%s1 + $0x48] sm:$0xff]
  %v32 = vld [vmem:[%s1 + $0x50] sm:$0xff]
  %v33 = vld [vmem:[%s1 + $0x58] sm:$0xff]
  %v34 = vld [vmem:[%s1 + $0x60] sm:$0xff]
  %v35 = vld [vmem:[%s1 + $0x68] sm:$0xff]
  %v36 = vld [vmem:[%s1 + $0x70] sm:$0xff]
  %v37 = vld [vmem:[%s1 + $0x78] sm:$0xff]
  %v38 = vld [vmem:[%s2] sm:$0xf]
  %v40 = vperm.slane %v38, 0
  %v41 = vperm.slane %v38, 1
  %v42 = vperm.slane %v38, 2
  %v43 = vperm.slane %v38, 3
  %vm48 = vcmask 261120
  %v50 = vsel %vm48, %v14, 0
  %v53 = vsel %vm48, %v15, 0
  %v56 = vsel %vm48, %v16, 0
  %v59 = vsel %vm48, %v17, 0
  %v62 = vsel %vm48, %v18, 0
  %v65 = vsel %vm48, %v19, 0
  %v68 = vsel %vm48, %v20, 0
  %v71 = vsel %vm48, %v21, 0
  %73 = vmatpush.msra.mxu0 0.0
  %74 = vmatpush.msra.mxu0 0.0
  %75 = vmatpush.msra.mxu0 0.0
  %76 = vmatpush.msra.mxu0 0.0
  %77 = vmatpush.msra.mxu0 0.0
  %78 = vmatpush.msra.mxu0 0.0
  %79 = vmatpush.msra.mxu0 0.0
  %80 = vmatpush.msra.mxu0 0.0
  %81 = vmatpush.msra.mxu0 0.0
  %82 = vmatpush.msra.mxu0 0.0
  %83 = vmatpush.msra.mxu0 0.0
  %84 = vmatpush.msra.mxu0 0.0
  %85 = vmatpush.msra.mxu0 %v34
  %86 = vmatpush.msra.mxu0 %v30
  %87 = vmatpush.msra.mxu0 %v26
  %88 = vmatpush.msra.mxu0 %v22
  %89 = vmatmul.f32.gmra.mxu0 %v50
  %v90 = vpop.f32.mrf.mxu0
  %v91 = vadd.f32 %v40, %v90
  %92 = vmatmul.f32.gmra.mxu0 %v53
  %v93 = vpop.f32.mrf.mxu0
  %v94 = vadd.f32 %v40, %v93
  %95 = vmatmul.f32.gmra.mxu0 %v56
  %v96 = vpop.f32.mrf.mxu0
  %v97 = vadd.f32 %v40, %v96
  %98 = vmatmul.f32.gmra.mxu0 %v59
  %v99 = vpop.f32.mrf.mxu0
  %v100 = vadd.f32 %v40, %v99
  %101 = vmatmul.f32.gmra.mxu0 %v62
  %v102 = vpop.f32.mrf.mxu0
  %v103 = vadd.f32 %v40, %v102
  %104 = vmatmul.f32.gmra.mxu0 %v65
  %v105 = vpop.f32.mrf.mxu0
  %v106 = vadd.f32 %v40, %v105
  %107 = vmatmul.f32.gmra.mxu0 %v68
  %v108 = vpop.f32.mrf.mxu0
  %v109 = vadd.f32 %v40, %v108
  %110 = vmatmul.f32.gmra.mxu0 %v71
  %v111 = vpop.f32.mrf.mxu0
  %v112 = vadd.f32 %v40, %v111
  %113 = vdwg.mxu0
  %114 = vmatpush.msra.mxu0 0.0
  %115 = vmatpush.msra.mxu0 0.0
  %116 = vmatpush.msra.mxu0 0.0
  %117 = vmatpush.msra.mxu0 0.0
  %118 = vmatpush.msra.mxu0 0.0
  %119 = vmatpush.msra.mxu0 0.0
  %120 = vmatpush.msra.mxu0 0.0
  %121 = vmatpush.msra.mxu0 0.0
  %122 = vmatpush.msra.mxu0 0.0
  %123 = vmatpush.msra.mxu0 0.0
  %124 = vmatpush.msra.mxu0 0.0
  %125 = vmatpush.msra.mxu0 0.0
  %126 = vmatpush.msra.mxu0 %v35
  %127 = vmatpush.msra.mxu0 %v31
  %128 = vmatpush.msra.mxu0 %v27
  %129 = vmatpush.msra.mxu0 %v23
  %130 = vmatmul.f32.gmra.mxu0 %v50
  %v131 = vpop.f32.mrf.mxu0
  %v132 = vadd.f32 %v41, %v131
  %133 = vmatmul.f32.gmra.mxu0 %v53
  %v134 = vpop.f32.mrf.mxu0
  %v135 = vadd.f32 %v41, %v134
  %136 = vmatmul.f32.gmra.mxu0 %v56
  %v137 = vpop.f32.mrf.mxu0
  %v138 = vadd.f32 %v41, %v137
  %139 = vmatmul.f32.gmra.mxu0 %v59
  %v140 = vpop.f32.mrf.mxu0
  %v141 = vadd.f32 %v41, %v140
  %142 = vmatmul.f32.gmra.mxu0 %v62
  %v143 = vpop.f32.mrf.mxu0
  %v144 = vadd.f32 %v41, %v143
  %145 = vmatmul.f32.gmra.mxu0 %v65
  %v146 = vpop.f32.mrf.mxu0
  %v147 = vadd.f32 %v41, %v146
  %148 = vmatmul.f32.gmra.mxu0 %v68
  %v149 = vpop.f32.mrf.mxu0
  %v150 = vadd.f32 %v41, %v149
  %151 = vmatmul.f32.gmra.mxu0 %v71
  %v152 = vpop.f32.mrf.mxu0
  %v153 = vadd.f32 %v41, %v152
  %154 = vdwg.mxu0
  %155 = vmatpush.msra.mxu0 0.0
  %156 = vmatpush.msra.mxu0 0.0
  %157 = vmatpush.msra.mxu0 0.0
  %158 = vmatpush.msra.mxu0 0.0
  %159 = vmatpush.msra.mxu0 0.0
  %160 = vmatpush.msra.mxu0 0.0
  %161 = vmatpush.msra.mxu0 0.0
  %162 = vmatpush.msra.mxu0 0.0
  %163 = vmatpush.msra.mxu0 0.0
  %164 = vmatpush.msra.mxu0 0.0
  %165 = vmatpush.msra.mxu0 0.0
  %166 = vmatpush.msra.mxu0 0.0
  %167 = vmatpush.msra.mxu0 %v36
  %168 = vmatpush.msra.mxu0 %v32
  %169 = vmatpush.msra.mxu0 %v28
  %170 = vmatpush.msra.mxu0 %v24
  %171 = vmatmul.f32.gmra.mxu0 %v50
  %v172 = vpop.f32.mrf.mxu0
  %v173 = vadd.f32 %v42, %v172
  %174 = vmatmul.f32.gmra.mxu0 %v53
  %v175 = vpop.f32.mrf.mxu0
  %v176 = vadd.f32 %v42, %v175
  %177 = vmatmul.f32.gmra.mxu0 %v56
  %v178 = vpop.f32.mrf.mxu0
  %v179 = vadd.f32 %v42, %v178
  %180 = vmatmul.f32.gmra.mxu0 %v59
  %v181 = vpop.f32.mrf.mxu0
  %v182 = vadd.f32 %v42, %v181
  %183 = vmatmul.f32.gmra.mxu0 %v62
  %v184 = vpop.f32.mrf.mxu0
  %v185 = vadd.f32 %v42, %v184
  %186 = vmatmul.f32.gmra.mxu0 %v65
  %v187 = vpop.f32.mrf.mxu0
  %v188 = vadd.f32 %v42, %v187
  %189 = vmatmul.f32.gmra.mxu0 %v68
  %v190 = vpop.f32.mrf.mxu0
  %v191 = vadd.f32 %v42, %v190
  %192 = vmatmul.f32.gmra.mxu0 %v71
  %v193 = vpop.f32.mrf.mxu0
  %v194 = vadd.f32 %v42, %v193
  %195 = vdwg.mxu0
  %196 = vmatpush.msra.mxu0 0.0
  %197 = vmatpush.msra.mxu0 0.0
  %198 = vmatpush.msra.mxu0 0.0
  %199 = vmatpush.msra.mxu0 0.0
  %200 = vmatpush.msra.mxu0 0.0
  %201 = vmatpush.msra.mxu0 0.0
  %202 = vmatpush.msra.mxu0 0.0
  %203 = vmatpush.msra.mxu0 0.0
  %204 = vmatpush.msra.mxu0 0.0
  %205 = vmatpush.msra.mxu0 0.0
  %206 = vmatpush.msra.mxu0 0.0
  %207 = vmatpush.msra.mxu0 0.0
  %208 = vmatpush.msra.mxu0 %v37
  %209 = vmatpush.msra.mxu0 %v33
  %210 = vmatpush.msra.mxu0 %v29
  %211 = vmatpush.msra.mxu0 %v25
  %212 = vmatmul.f32.gmra.mxu0 %v50
  %v213 = vpop.f32.mrf.mxu0
  %v214 = vadd.f32 %v43, %v213
  %215 = vmatmul.f32.gmra.mxu0 %v53
  %v216 = vpop.f32.mrf.mxu0
  %v217 = vadd.f32 %v43, %v216
  %218 = vmatmul.f32.gmra.mxu0 %v56
  %v219 = vpop.f32.mrf.mxu0
  %v220 = vadd.f32 %v43, %v219
  %221 = vmatmul.f32.gmra.mxu0 %v59
  %v222 = vpop.f32.mrf.mxu0
  %v223 = vadd.f32 %v43, %v222
  %224 = vmatmul.f32.gmra.mxu0 %v62
  %v225 = vpop.f32.mrf.mxu0
  %v226 = vadd.f32 %v43, %v225
  %227 = vmatmul.f32.gmra.mxu0 %v65
  %v228 = vpop.f32.mrf.mxu0
  %v229 = vadd.f32 %v43, %v228
  %230 = vmatmul.f32.gmra.mxu0 %v68
  %v231 = vpop.f32.mrf.mxu0
  %v232 = vadd.f32 %v43, %v231
  %233 = vmatmul.f32.gmra.mxu0 %v71
  %v234 = vpop.f32.mrf.mxu0
  %v235 = vadd.f32 %v43, %v234
  %236 = vdwg.mxu0
  %237 = vst [vmem:[%s3] sm:$0xff] %v91
  %238 = vst [vmem:[%s3 + $0x8] sm:$0xff] %v132
  %239 = vst [vmem:[%s3 + $0x10] sm:$0xff] %v173
  %240 = vst [vmem:[%s3 + $0x18] sm:$0xff] %v214
  %241 = vst [vmem:[%s3 + $0x20] sm:$0xff] %v94
  %242 = vst [vmem:[%s3 + $0x28] sm:$0xff] %v135
  %243 = vst [vmem:[%s3 + $0x30] sm:$0xff] %v176
  %244 = vst [vmem:[%s3 + $0x38] sm:$0xff] %v217
  %245 = vst [vmem:[%s3 + $0x40] sm:$0xff] %v97
  %246 = vst [vmem:[%s3 + $0x48] sm:$0xff] %v138
  %247 = vst [vmem:[%s3 + $0x50] sm:$0xff] %v179
  %248 = vst [vmem:[%s3 + $0x58] sm:$0xff] %v220
  %249 = vst [vmem:[%s3 + $0x60] sm:$0xff] %v100
  %250 = vst [vmem:[%s3 + $0x68] sm:$0xff] %v141
  %251 = vst [vmem:[%s3 + $0x70] sm:$0xff] %v182
  %252 = vst [vmem:[%s3 + $0x78] sm:$0xff] %v223
  %253 = vst [vmem:[%s3 + $0x80] sm:$0xff] %v103
  %254 = vst [vmem:[%s3 + $0x88] sm:$0xff] %v144
  %255 = vst [vmem:[%s3 + $0x90] sm:$0xff] %v185
  %256 = vst [vmem:[%s3 + $0x98] sm:$0xff] %v226
  %257 = vst [vmem:[%s3 + $0xa0] sm:$0xff] %v106
  %258 = vst [vmem:[%s3 + $0xa8] sm:$0xff] %v147
  %259 = vst [vmem:[%s3 + $0xb0] sm:$0xff] %v188
  %260 = vst [vmem:[%s3 + $0xb8] sm:$0xff] %v229
  %261 = vst [vmem:[%s3 + $0xc0] sm:$0xff] %v109
  %262 = vst [vmem:[%s3 + $0xc8] sm:$0xff] %v150
  %263 = vst [vmem:[%s3 + $0xd0] sm:$0xff] %v191
  %264 = vst [vmem:[%s3 + $0xd8] sm:$0xff] %v232
  %265 = vst [vmem:[%s3 + $0xe0] sm:$0xff] %v112
  %266 = vst [vmem:[%s3 + $0xe8] sm:$0xff] %v153
  %267 = vst [vmem:[%s3 + $0xf0] sm:$0xff] %v194
  %268 = vst [vmem:[%s3 + $0xf8] sm:$0xff] %v235
  // Predicated region
  $region14: #{decoder_rnn_forward.3} parent=0 // pred_check
    _
  $region15: #{decoder_rnn_forward.3} parent=0 // pred_check_branch
    %270 = sbr.rel (0) target = $region17
  $region16: #{decoder_rnn_forward.3} parent=0 // pred_region
    _
  $region17: #{decoder_rnn_forward.3} parent=0 // pred_fallthru
    _
  // Predicated region
  $region18: #{decoder_rnn_forward.3} parent=0 // pred_check
    _
  $region19: #{decoder_rnn_forward.3} parent=0 // pred_check_branch
    %272 = sbr.rel (0) target = $region21
  $region20: #{decoder_rnn_forward.3} parent=0 // pred_region
    _
  $region21: #{decoder_rnn_forward.3} parent=0 // pred_fallthru
    _

// kernel: decoder_rnn_forward.4
$region0: #{decoder_rnn_forward.4}
  #allocation0 [shape = 'u32[]', space=smem, size = 0x4, offset = 0x4, fixed_abs, tag = 'smem constant byte address 0x4 - core index']
  #allocation1 [shape = 'u32[72,128]{1,0:T(1,128)}', space=vmem, size = 0x9000, scoped, tag = 'internal scratch']
  #allocation2 [shape = 'f32[8,128]{1,0:T(8,128)}', space=vmem, size = 0x1000, scoped, tag = 'scratch operand']
  #allocation3 [shape = 'f32[8,128]{1,0:T(8,128)}', space=vmem, size = 0x1000, scoped, tag = 'scratch operand']
  %s0 = inlined_call_operand.vmem [shape: f32[8,8,512], index: 0, kind: input, shape index: {}]
  %s1 = inlined_call_operand.vmem [shape: f32[128,512], index: 1, kind: input, shape index: {}]
  %s2 = inlined_call_operand.vmem [shape: f32[8,8,128], index: 2, kind: output, shape index: {}]
  %s3 = sld [smem:[#allocation0]]
  $region45: #{decoder_rnn_forward.4} parent=0
    _
  %s5 = ssub.s32 1, %s3
  %s6 = scalar_select 0, %s5, %s3
  loop: start=0, step=1, limit=10
  $region2: #{decoder_rnn_forward.4} parent=0 // loop_pre_header
    _
  $region3: #{decoder_rnn_forward.4} parent=0 // loop_header
    %s8 = sphi 0, %s12
    %p9 = scmp.ge.s32.totalorder %s8, 10
    %s15 = sphi 0, %s27
    %s16 = sphi 0, %s23
    %s17 = sphi 0, %s15
    %s18 = sphi 0, %s16
    %s19 = sphi 0, %s17
    %s20 = sphi 0, %s18
    %s32 = sphi 0, %s34
    %s35 = sphi 0, %s32
    %s36 = sphi 0, %s35
    %s52 = sphi 0, %s36
    %s56 = sphi 0, %s56
    %s58 = sphi 0, %s56
    %s59 = sphi 0, %s58
    %s73 = sphi 0, %s59
    %s81 = sphi 0, %s83
    %s84 = sphi 0, %s81
    %s85 = sphi 0, %s84
    %s101 = sphi 0, %s85
  $region4: #{decoder_rnn_forward.4} parent=0 // loop_header_branch
    %11 = sbr.rel (%p9) target = $region8
  $region5: #{decoder_rnn_forward.4} parent=0 // loop_body
    %s13 = ssub.s32 %s8, 1
    %s14 = ssub.s32 %s8, 2
    %s21 = sadd.s32 1, %s16
    %p22 = scmp.ge.s32.totalorder %s21, 8
    %s23 = scalar_select %p22, 0, %s21
    %s24 = sadd.s32 1, %s15
    %s25 = scalar_select %p22, %s24, %s15
    %p26 = scmp.ge.s32.totalorder %s25, 1
    %s27 = scalar_select %p26, 0, %s25
    %s28 = ssub.s32 %s16, %s23
    %s29 = ssub.s32 %s15, %s27
    %s30 = sor.u32 %s28, %s29
    %p31 = scmp.eq.s32.totalorder %s30, 0
    %s33 = sadd.s32 %s32, 1
    %s34 = scalar_select %p31, %s32, %s33
    %p37 = pneg %p31
    %p38 = scmp.eq.s32.totalorder %s8, 7
    %p39 = por %p37, %p38
    %p40 = scmp.ne.s32.totalorder %s32, %s35
    %p41 = scmp.eq.s32.totalorder %s8, 0
    %p42 = por %p40, %p41
    %p43 = scmp.ne.s32.totalorder %s32, %s35
    %p44 = scmp.eq.s32.totalorder %s13, 7
    %p45 = por %p43, %p44
    %p46 = scmp.ne.s32.totalorder %s35, %s36
    %p47 = scmp.eq.s32.totalorder %s13, 0
    %p48 = por %p46, %p47
    %p49 = scmp.ne.s32.totalorder %s35, %s36
    %p50 = scmp.eq.s32.totalorder %s14, 7
    %p51 = por %p49, %p50
    %p53 = scmp.ne.s32.totalorder %s36, %s52
    %p54 = scmp.eq.s32.totalorder %s14, 0
    %p55 = por %p53, %p54
    %s57 = sadd.s32 %s56, 1
    %p60 = scmp.eq.s32.totalorder %s8, 7
    %p61 = scmp.ne.s32.totalorder %s56, %s58
    %p62 = scmp.eq.s32.totalorder %s8, 0
    %p63 = por %p61, %p62
    %p64 = scmp.ne.s32.totalorder %s56, %s58
    %p65 = scmp.eq.s32.totalorder %s13, 7
    %p66 = por %p64, %p65
    %p67 = scmp.ne.s32.totalorder %s58, %s59
    %p68 = scmp.eq.s32.totalorder %s13, 0
    %p69 = por %p67, %p68
    %p70 = scmp.ne.s32.totalorder %s58, %s59
    %p71 = scmp.eq.s32.totalorder %s14, 7
    %p72 = por %p70, %p71
    %p74 = scmp.ne.s32.totalorder %s59, %s73
    %p75 = scmp.eq.s32.totalorder %s14, 0
    %p76 = por %p74, %p75
    %s77 = ssub.s32 %s16, %s23
    %s78 = ssub.s32 %s15, %s27
    %s79 = sor.u32 %s77, %s78
    %p80 = scmp.eq.s32.totalorder %s79, 0
    %s82 = sadd.s32 %s81, 1
    %s83 = scalar_select %p80, %s81, %s82
    %p86 = pneg %p80
    %p87 = scmp.eq.s32.totalorder %s8, 7
    %p88 = por %p86, %p87
    %p89 = scmp.ne.s32.totalorder %s81, %s84
    %p90 = scmp.eq.s32.totalorder %s8, 0
    %p91 = por %p89, %p90
    %p92 = scmp.ne.s32.totalorder %s81, %s84
    %p93 = scmp.eq.s32.totalorder %s13, 7
    %p94 = por %p92, %p93
    %p95 = scmp.ne.s32.totalorder %s84, %s85
    %p96 = scmp.eq.s32.totalorder %s13, 0
    %p97 = por %p95, %p96
    %p98 = scmp.ne.s32.totalorder %s84, %s85
    %p99 = scmp.eq.s32.totalorder %s14, 7
    %p100 = por %p98, %p99
    %p102 = scmp.ne.s32.totalorder %s85, %s101
    %p103 = scmp.eq.s32.totalorder %s14, 0
    %p104 = por %p102, %p103
    %p105 = scmp.le.s32.totalorder 1, %s8
    %p106 = scmp.lt.s32.totalorder %s8, 9
    %p107 = pnand %p105, %p106
    %p108 = pneg %p107
    // Predicated region
    $region9: #{decoder_rnn_forward.4} parent=5 // pred_check
      _
    $region10: #{decoder_rnn_forward.4} parent=5 // pred_check_branch
      %110 = sbr.rel (%p107) target = $region12
    $region11: #{decoder_rnn_forward.4} parent=5 // pred_region
      %s111 = ssub.s32 %s8, 1
      // Predicated region
      $region13: #{decoder_rnn_forward.4} parent=11 // pred_check
        %p112 = pneg %p69
      $region14: #{decoder_rnn_forward.4} parent=11 // pred_check_branch
        %114 = sbr.rel (%p112) target = $region16
      $region15: #{decoder_rnn_forward.4} parent=11 // pred_region
        _
      $region16: #{decoder_rnn_forward.4} parent=11 // pred_fallthru
        _
    $region12: #{decoder_rnn_forward.4} parent=5 // pred_fallthru
      _
    %p115 = scmp.lt.s32.totalorder %s8, 8
    // Predicated region
    $region17: #{decoder_rnn_forward.4} parent=5 // pred_check
      %p116 = pneg %p115
    $region18: #{decoder_rnn_forward.4} parent=5 // pred_check_branch
      %118 = sbr.rel (%p116) target = $region20
    $region19: #{decoder_rnn_forward.4} parent=5 // pred_region
      // Predicated region
      $region21: #{decoder_rnn_forward.4} parent=19 // pred_check
        %p119 = pneg %p42
      $region22: #{decoder_rnn_forward.4} parent=19 // pred_check_branch
        %121 = sbr.rel (%p119) target = $region24
      $region23: #{decoder_rnn_forward.4} parent=19 // pred_region
        %p122 = scmp.lt.s32.totalorder %s16, 7
        %s123 = scalar_select %p122, %s16, 7
        %p124 = scmp.lt.s32.totalorder %s15, 0
        %s125 = scalar_select %p124, %s15, 0
        %s126 = smul.addr %s125, 4
        %s127 = smul.addr %s123, 4
        %s128 = sadd.s32 %s126, %s127
        %s129 = smul.addr %s128, 8
        %s130 = scalar_lea.vmem %s0, %s129
      $region24: #{decoder_rnn_forward.4} parent=19 // pred_fallthru
        _
    $region20: #{decoder_rnn_forward.4} parent=5 // pred_fallthru
      _
    %p131 = scmp.le.s32.totalorder 1, %s8
    %p132 = scmp.lt.s32.totalorder %s8, 9
    %p133 = pnand %p131, %p132
    %p134 = pneg %p133
    // Predicated region
    $region25: #{decoder_rnn_forward.4} parent=5 // pred_check
      _
    $region26: #{decoder_rnn_forward.4} parent=5 // pred_check_branch
      %136 = sbr.rel (%p133) target = $region28
    $region27: #{decoder_rnn_forward.4} parent=5 // pred_region
      %s137 = ssub.s32 %s8, 1
      %p138 = scmp.lt.s32.totalorder %s18, 7
      %s139 = scalar_select %p138, %s18, 7
      %p140 = scmp.lt.s32.totalorder %s17, 0
      %s141 = scalar_select %p140, %s17, 0
      %s142 = smul.addr %s141, 4
      %s143 = smul.addr %s139, 4
      %s144 = sadd.s32 %s142, %s143
      %s145 = smul.addr %s144, 8
      %s146 = scalar_lea.vmem %s0, %s145
      %p147 = pneg %p48
      %p148 = pneg %p45
      %p149 = pneg %p69
      %p150 = pneg %p66
      %p151 = pneg %p97
      %p152 = pneg %p94
      %p153 = scmp.lt.s32.totalorder %s18, 7
      %s154 = scalar_select %p153, %s18, 7
      %p155 = scmp.lt.s32.totalorder %s17, 0
      %s156 = scalar_select %p155, %s17, 0
      %s157 = sadd.s32 %s156, %s154
      %s158 = smul.addr %s157, 8
      %s159 = scalar_lea.vmem %s2, %s158
      %p160 = scmp.lt.s32.totalorder %s18, 7
      %s161 = scalar_select %p160, %s18, 7
      %p162 = scmp.lt.s32.totalorder %s17, 0
      %s163 = scalar_select %p162, %s17, 0
      %s164 = smul.addr %s163, 4
      %s165 = smul.addr %s161, 4
      %s166 = sadd.s32 %s164, %s165
      %s167 = smul.addr %s166, 8
      %s168 = scalar_lea.vmem %s0, %s167
      %p169 = scmp.lt.s32.totalorder %s18, 7
      %s170 = scalar_select %p169, %s18, 7
      %p171 = scmp.lt.s32.totalorder %s17, 0
      %s172 = scalar_select %p171, %s17, 0
      %s173 = sadd.s32 %s172, %s170
      %s174 = smul.addr %s173, 8
      %s175 = scalar_lea.vmem %s2, %s174
      %p176 = scmp.eq.s32.totalorder %s18, 0
      // Predicated region
      $region29: #{decoder_rnn_forward.4} parent=27 // pred_check
        %p177 = pneg %p176
      $region30: #{decoder_rnn_forward.4} parent=27 // pred_check_branch
        %179 = sbr.rel (%p177) target = $region32
      $region31: #{decoder_rnn_forward.4} parent=27 // pred_region
        %180 = vst [vmem:[#allocation2] sm:$0xff] 0.0
        %181 = vst [vmem:[#allocation3] sm:$0xff] 0.0
      $region32: #{decoder_rnn_forward.4} parent=27 // pred_fallthru
        _
      %v182 = vld [vmem:[%s168] sm:$0xff]
      %v183 = vld [vmem:[%s168 + $0x8] sm:$0xff]
      %v184 = vld [vmem:[%s168 + $0x10] sm:$0xff]
      %v185 = vld [vmem:[%s168 + $0x18] sm:$0xff]
      %v186 = vld [vmem:[#allocation2] sm:$0xff]
      %v187 = vld [vmem:[%s1] sm:$0xff]
      %v188 = vld [vmem:[%s1 + $0x8] sm:$0xff]
      %v189 = vld [vmem:[%s1 + $0x10] sm:$0xff]
      %v190 = vld [vmem:[%s1 + $0x18] sm:$0xff]
      %v191 = vld [vmem:[%s1 + $0x20] sm:$0xff]
      %v192 = vld [vmem:[%s1 + $0x28] sm:$0xff]
      %v193 = vld [vmem:[%s1 + $0x30] sm:$0xff]
      %v194 = vld [vmem:[%s1 + $0x38] sm:$0xff]
      %v195 = vld [vmem:[%s1 + $0x40] sm:$0xff]
      %v196 = vld [vmem:[%s1 + $0x48] sm:$0xff]
      %v197 = vld [vmem:[%s1 + $0x50] sm:$0xff]
      %v198 = vld [vmem:[%s1 + $0x58] sm:$0xff]
      %v199 = vld [vmem:[%s1 + $0x60] sm:$0xff]
      %v200 = vld [vmem:[%s1 + $0x68] sm:$0xff]
      %v201 = vld [vmem:[%s1 + $0x70] sm:$0xff]
      %v202 = vld [vmem:[%s1 + $0x78] sm:$0xff]
      %v203 = vld [vmem:[%s1 + $0x80] sm:$0xff]
      %v204 = vld [vmem:[%s1 + $0x88] sm:$0xff]
      %v205 = vld [vmem:[%s1 + $0x90] sm:$0xff]
      %v206 = vld [vmem:[%s1 + $0x98] sm:$0xff]
      %v207 = vld [vmem:[%s1 + $0xa0] sm:$0xff]
      %v208 = vld [vmem:[%s1 + $0xa8] sm:$0xff]
      %v209 = vld [vmem:[%s1 + $0xb0] sm:$0xff]
      %v210 = vld [vmem:[%s1 + $0xb8] sm:$0xff]
      %v211 = vld [vmem:[%s1 + $0xc0] sm:$0xff]
      %v212 = vld [vmem:[%s1 + $0xc8] sm:$0xff]
      %v213 = vld [vmem:[%s1 + $0xd0] sm:$0xff]
      %v214 = vld [vmem:[%s1 + $0xd8] sm:$0xff]
      %v215 = vld [vmem:[%s1 + $0xe0] sm:$0xff]
      %v216 = vld [vmem:[%s1 + $0xe8] sm:$0xff]
      %v217 = vld [vmem:[%s1 + $0xf0] sm:$0xff]
      %v218 = vld [vmem:[%s1 + $0xf8] sm:$0xff]
      %v219 = vld [vmem:[%s1 + $0x100] sm:$0xff]
      %v220 = vld [vmem:[%s1 + $0x108] sm:$0xff]
      %v221 = vld [vmem:[%s1 + $0x110] sm:$0xff]
      %v222 = vld [vmem:[%s1 + $0x118] sm:$0xff]
      %v223 = vld [vmem:[%s1 + $0x120] sm:$0xff]
      %v224 = vld [vmem:[%s1 + $0x128] sm:$0xff]
      %v225 = vld [vmem:[%s1 + $0x130] sm:$0xff]
      %v226 = vld [vmem:[%s1 + $0x138] sm:$0xff]
      %v227 = vld [vmem:[%s1 + $0x140] sm:$0xff]
      %v228 = vld [vmem:[%s1 + $0x148] sm:$0xff]
      %v229 = vld [vmem:[%s1 + $0x150] sm:$0xff]
      %v230 = vld [vmem:[%s1 + $0x158] sm:$0xff]
      %v231 = vld [vmem:[%s1 + $0x160] sm:$0xff]
      %v232 = vld [vmem:[%s1 + $0x168] sm:$0xff]
      %v233 = vld [vmem:[%s1 + $0x170] sm:$0xff]
      %v234 = vld [vmem:[%s1 + $0x178] sm:$0xff]
      %v235 = vld [vmem:[%s1 + $0x180] sm:$0xff]
      %v236 = vld [vmem:[%s1 + $0x188] sm:$0xff]
      %v237 = vld [vmem:[%s1 + $0x190] sm:$0xff]
      %v238 = vld [vmem:[%s1 + $0x198] sm:$0xff]
      %v239 = vld [vmem:[%s1 + $0x1a0] sm:$0xff]
      %v240 = vld [vmem:[%s1 + $0x1a8] sm:$0xff]
      %v241 = vld [vmem:[%s1 + $0x1b0] sm:$0xff]
      %v242 = vld [vmem:[%s1 + $0x1b8] sm:$0xff]
      %v243 = vld [vmem:[%s1 + $0x1c0] sm:$0xff]
      %v244 = vld [vmem:[%s1 + $0x1c8] sm:$0xff]
      %v245 = vld [vmem:[%s1 + $0x1d0] sm:$0xff]
      %v246 = vld [vmem:[%s1 + $0x1d8] sm:$0xff]
      %v247 = vld [vmem:[%s1 + $0x1e0] sm:$0xff]
      %v248 = vld [vmem:[%s1 + $0x1e8] sm:$0xff]
      %v249 = vld [vmem:[%s1 + $0x1f0] sm:$0xff]
      %v250 = vld [vmem:[%s1 + $0x1f8] sm:$0xff]
      %251 = vmatpush.msra.mxu0 %v247
      %252 = vmatpush.msra.mxu0 %v243
      %253 = vmatpush.msra.mxu0 %v239
      %254 = vmatpush.msra.mxu0 %v235
      %255 = vmatpush.msra.mxu0 %v231
      %256 = vmatpush.msra.mxu0 %v227
      %257 = vmatpush.msra.mxu0 %v223
      %258 = vmatpush.msra.mxu0 %v219
      %259 = vmatpush.msra.mxu0 %v215
      %260 = vmatpush.msra.mxu0 %v211
      %261 = vmatpush.msra.mxu0 %v207
      %262 = vmatpush.msra.mxu0 %v203
      %263 = vmatpush.msra.mxu0 %v199
      %264 = vmatpush.msra.mxu0 %v195
      %265 = vmatpush.msra.mxu0 %v191
      %266 = vmatpush.msra.mxu0 %v187
      %267 = vmatmul.f32.gmra.mxu0 %v186
      %v268 = vpop.f32.mrf.mxu0
      %v269 = vadd.f32 0.0, %v268
      %270 = vdwg.mxu0
      %271 = vmatpush.msra.mxu0 %v248
      %272 = vmatpush.msra.mxu0 %v244
      %273 = vmatpush.msra.mxu0 %v240
      %274 = vmatpush.msra.mxu0 %v236
      %275 = vmatpush.msra.mxu0 %v232
      %276 = vmatpush.msra.mxu0 %v228
      %277 = vmatpush.msra.mxu0 %v224
      %278 = vmatpush.msra.mxu0 %v220
      %279 = vmatpush.msra.mxu0 %v216
      %280 = vmatpush.msra.mxu0 %v212
      %281 = vmatpush.msra.mxu0 %v208
      %282 = vmatpush.msra.mxu0 %v204
      %283 = vmatpush.msra.mxu0 %v200
      %284 = vmatpush.msra.mxu0 %v196
      %285 = vmatpush.msra.mxu0 %v192
      %286 = vmatpush.msra.mxu0 %v188
      %287 = vmatmul.f32.gmra.mxu0 %v186
      %v288 = vpop.f32.mrf.mxu0
      %v289 = vadd.f32 0.0, %v288
      %290 = vdwg.mxu0
      %291 = vmatpush.msra.mxu0 %v249
      %292 = vmatpush.msra.mxu0 %v245
      %293 = vmatpush.msra.mxu0 %v241
      %294 = vmatpush.msra.mxu0 %v237
      %295 = vmatpush.msra.mxu0 %v233
      %296 = vmatpush.msra.mxu0 %v229
      %297 = vmatpush.msra.mxu0 %v225
      %298 = vmatpush.msra.mxu0 %v221
      %299 = vmatpush.msra.mxu0 %v217
      %300 = vmatpush.msra.mxu0 %v213
      %301 = vmatpush.msra.mxu0 %v209
      %302 = vmatpush.msra.mxu0 %v205
      %303 = vmatpush.msra.mxu0 %v201
      %304 = vmatpush.msra.mxu0 %v197
      %305 = vmatpush.msra.mxu0 %v193
      %306 = vmatpush.msra.mxu0 %v189
      %307 = vmatmul.f32.gmra.mxu0 %v186
      %v308 = vpop.f32.mrf.mxu0
      %v309 = vadd.f32 0.0, %v308
      %310 = vdwg.mxu0
      %311 = vmatpush.msra.mxu0 %v250
      %312 = vmatpush.msra.mxu0 %v246
      %313 = vmatpush.msra.mxu0 %v242
      %314 = vmatpush.msra.mxu0 %v238
      %315 = vmatpush.msra.mxu0 %v234
      %316 = vmatpush.msra.mxu0 %v230
      %317 = vmatpush.msra.mxu0 %v226
      %318 = vmatpush.msra.mxu0 %v222
      %319 = vmatpush.msra.mxu0 %v218
      %320 = vmatpush.msra.mxu0 %v214
      %321 = vmatpush.msra.mxu0 %v210
      %322 = vmatpush.msra.mxu0 %v206
      %323 = vmatpush.msra.mxu0 %v202
      %324 = vmatpush.msra.mxu0 %v198
      %325 = vmatpush.msra.mxu0 %v194
      %326 = vmatpush.msra.mxu0 %v190
      %327 = vmatmul.f32.gmra.mxu0 %v186
      %v328 = vpop.f32.mrf.mxu0
      %v329 = vadd.f32 0.0, %v328
      %330 = vdwg.mxu0
      %v331 = vadd.f32 %v182, %v269
      %v332 = vadd.f32 %v183, %v289
      %v333 = vadd.f32 %v184, %v309
      %v334 = vadd.f32 %v185, %v329
      %v335 = vxor.u32 %v331, 2147483648
      %v336 = vmul.f32 %v335, 1.442695
      %v337 = vpow.pop %v336
      %v338 = vadd.f32 %v337, 1.0
      %v339 = vrcp.pop %v338
      %v340 = vmul.f32 %v338, %v339
      %v341 = vsub.f32 1.0, %v340
      %v342 = vmul.f32 %v339, %v341
      %v343 = vadd.f32 %v339, %v342
      %vm344 = vweird.f32 %v338
      %vm345 = vweird.f32 %v339
      %vm346 = vmor %vm344, %vm345
      %v347 = vsel %vm346, %v339, %v343
      %v348 = vand.u32 2147483647, %v338
      %vm349 = vcmp.eq.f32.partialorder %v348, 8.507059e+37
      %v350 = vand.u32 %v338, 2147483648
      %v351 = vor.u32 1.1754944e-38, %v350
      %v352 = vsel %vm349, %v351, %v347
      %v353 = vmul.f32 1.0, %v352
      %v354 = vxor.u32 %v332, 2147483648
      %v355 = vmul.f32 %v354, 1.442695
      %v356 = vpow.pop %v355
      %v357 = vadd.f32 %v356, 1.0
      %v358 = vrcp.pop %v357
      %v359 = vmul.f32 %v357, %v358
      %v360 = vsub.f32 1.0, %v359
      %v361 = vmul.f32 %v358, %v360
      %v362 = vadd.f32 %v358, %v361
      %vm363 = vweird.f32 %v357
      %vm364 = vweird.f32 %v358
      %vm365 = vmor %vm363, %vm364
      %v366 = vsel %vm365, %v358, %v362
      %v367 = vand.u32 2147483647, %v357
      %vm368 = vcmp.eq.f32.partialorder %v367, 8.507059e+37
      %v369 = vand.u32 %v357, 2147483648
      %v370 = vor.u32 1.1754944e-38, %v369
      %v371 = vsel %vm368, %v370, %v366
      %v372 = vmul.f32 1.0, %v371
      %v373 = vtanh.pop %v333
      %v374 = vxor.u32 %v334, 2147483648
      %v375 = vmul.f32 %v374, 1.442695
      %v376 = vpow.pop %v375
      %v377 = vadd.f32 %v376, 1.0
      %v378 = vrcp.pop %v377
      %v379 = vmul.f32 %v377, %v378
      %v380 = vsub.f32 1.0, %v379
      %v381 = vmul.f32 %v378, %v380
      %v382 = vadd.f32 %v378, %v381
      %vm383 = vweird.f32 %v377
      %vm384 = vweird.f32 %v378
      %vm385 = vmor %vm383, %vm384
      %v386 = vsel %vm385, %v378, %v382
      %v387 = vand.u32 2147483647, %v377
      %vm388 = vcmp.eq.f32.partialorder %v387, 8.507059e+37
      %v389 = vand.u32 %v377, 2147483648
      %v390 = vor.u32 1.1754944e-38, %v389
      %v391 = vsel %vm388, %v390, %v386
      %v392 = vmul.f32 1.0, %v391
      %v393 = vld [vmem:[#allocation3] sm:$0xff]
      %v394 = vmul.f32 %v372, %v393
      %v395 = vmul.f32 %v353, %v373
      %v396 = vadd.f32 %v394, %v395
      %v397 = vtanh.pop %v396
      %v398 = vmul.f32 %v392, %v397
      %399 = vst [vmem:[#allocation3] sm:$0xff] %v396
      %400 = vst [vmem:[#allocation2] sm:$0xff] %v398
      %401 = vst [vmem:[%s175] sm:$0xff] %v398
      %p402 = scmp.lt.s32.totalorder %s18, 7
      %s403 = scalar_select %p402, %s18, 7
      %p404 = scmp.lt.s32.totalorder %s17, 0
      %s405 = scalar_select %p404, %s17, 0
      %s406 = sadd.s32 %s405, %s403
      %s407 = smul.addr %s406, 8
      %s408 = scalar_lea.vmem %s2, %s407
      // Predicated region
      $region33: #{decoder_rnn_forward.4} parent=27 // pred_check
        %p409 = pneg %p94
      $region34: #{decoder_rnn_forward.4} parent=27 // pred_check_branch
        %411 = sbr.rel (%p409) target = $region36
      $region35: #{decoder_rnn_forward.4} parent=27 // pred_region
        _
      $region36: #{decoder_rnn_forward.4} parent=27 // pred_fallthru
        _
    $region28: #{decoder_rnn_forward.4} parent=5 // pred_fallthru
      _
    %p412 = scmp.le.s32.totalorder 2, %s8
    // Predicated region
    $region37: #{decoder_rnn_forward.4} parent=5 // pred_check
      %p413 = pneg %p412
    $region38: #{decoder_rnn_forward.4} parent=5 // pred_check_branch
      %415 = sbr.rel (%p413) target = $region40
    $region39: #{decoder_rnn_forward.4} parent=5 // pred_region
      %s416 = ssub.s32 %s8, 2
      // Predicated region
      $region41: #{decoder_rnn_forward.4} parent=39 // pred_check
        %p417 = pneg %p100
      $region42: #{decoder_rnn_forward.4} parent=39 // pred_check_branch
        %419 = sbr.rel (%p417) target = $region44
      $region43: #{decoder_rnn_forward.4} parent=39 // pred_region
        %p420 = scmp.lt.s32.totalorder %s20, 7
        %s421 = scalar_select %p420, %s20, 7
        %p422 = scmp.lt.s32.totalorder %s19, 0
        %s423 = scalar_select %p422, %s19, 0
        %s424 = sadd.s32 %s423, %s421
        %s425 = smul.addr %s424, 8
        %s426 = scalar_lea.vmem %s2, %s425
      $region44: #{decoder_rnn_forward.4} parent=39 // pred_fallthru
        _
    $region40: #{decoder_rnn_forward.4} parent=5 // pred_fallthru
      _
  $region6: #{decoder_rnn_forward.4} parent=0 // loop_footer
    %s12 = sadd.s32 1, %s8
  $region7: #{decoder_rnn_forward.4} parent=0 // loop_footer_branch
    %7 = sbr.rel target = $region3
  $region8: #{decoder_rnn_forward.4} parent=0 // loop_exit
    _

</llo_original>
